<compile_context>
chip_gen: v7x
topology: tpu7x:2x2x1
jax: 0.10.0
libtpu: 0.0.40
codegen_flags: <defaults>
</compile_context>

<pallas_src>
import math
from functools import partial

import jax
import jax.numpy as jnp
import numpy as np
from jax import lax
from jax.experimental import pallas as pl
from jax.experimental.pallas import tpu as pltpu

_VMEM_LIMIT = 48 * 1024 * 1024  # above the 16/32 MiB scoped defaults, < v7x's 64 MiB


def _pick_tile(dim, target, align):
    """Tile for `dim`: `target` if it divides; else the largest multiple of `align`
    <= target that divides; else the full dim (full-extent blocks are always legal)."""
    if dim <= target:
        return dim
    if dim % target == 0:
        return target
    t = (target // align) * align
    while t >= align:
        if dim % t == 0:
            return t
        t -= align
    return dim  # TODO(synk): pad + mask ragged dims instead of one full-extent block.


def _pick_head_block(H, D):
    """Heads per attention grid step.  Whole H when H*D is small (out block == full C,
    always legal); otherwise the largest divisor hb of H with hb*D a multiple of 128
    (lane-dense output slab) and hb*D <= 1024 (VMEM budget)."""
    if H * D <= 1024:
        return H
    best = None
    for hb in range(1, H):
        if H % hb == 0 and (hb * D) % 128 == 0 and hb * D <= 1024:
            best = hb
    return best if best is not None else H


# --------------------------- tiled linear (x @ w + b) ---------------------------

def _linear_kernel(x_ref, w_ref, b_ref, o_ref, acc_ref):
    @pl.when(pl.program_id(2) == 0)
    def _init():
        acc_ref[...] = jnp.zeros_like(acc_ref)

    # Operands are already bf16 in HBM/VMEM; accumulate in f32 on the MXU.
    acc_ref[...] += jnp.dot(x_ref[...], w_ref[...],
                            preferred_element_type=jnp.float32)

    @pl.when(pl.program_id(2) == pl.num_programs(2) - 1)
    def _finish():
        o_ref[...] = (acc_ref[...] + b_ref[...]).astype(o_ref.dtype)


def pallas_linear(x2d, w, b, out_dtype=jnp.float32, tm=512, tn=512, tk=1024):
    """(N, K) bf16 @ (K, Cout) bf16 + b(1, Cout) f32 -> (N, Cout); f32 accumulation."""
    N, K = x2d.shape
    Kw, Cout = w.shape
    assert K == Kw
    tm = _pick_tile(N, tm, align=8)
    tn = _pick_tile(Cout, tn, align=128)
    tk = _pick_tile(K, tk, align=128)
    grid = (N // tm, Cout // tn, K // tk)
    return pl.pallas_call(
        _linear_kernel,
        grid=grid,
        in_specs=[
            pl.BlockSpec((tm, tk), lambda i, j, k: (i, k)),
            pl.BlockSpec((tk, tn), lambda i, j, k: (k, j)),
            pl.BlockSpec((1, tn), lambda i, j, k: (0, j)),
        ],
        out_specs=pl.BlockSpec((tm, tn), lambda i, j, k: (i, j)),
        out_shape=jax.ShapeDtypeStruct((N, Cout), out_dtype),
        scratch_shapes=[pltpu.VMEM((tm, tn), jnp.float32)],
        compiler_params=pltpu.CompilerParams(
            dimension_semantics=("parallel", "parallel", "arbitrary"),
            vmem_limit_bytes=_VMEM_LIMIT,
        ),
    )(x2d, w, b)


# ------------- prepass: L2-normalise q (with folded scale) & k, split heads -------------
# Reads the (B, L, 3, H, D) qkv slab and writes q/k/v as (B, H, L, D) bf16 slabs so the
# attention kernel gets head-leading blocks (batched MXU) with zero in-kernel transposes.
# This runs the normalisation exactly once per element instead of L/tq times per k-tile.

def _norm_split_kernel(scale_ref, q_ref, k_ref, v_ref, qn_ref, kn_ref, vn_ref):
    h = pl.program_id(1)
    eps = 1e-12
    # F.normalize(x, dim=-1, eps) == x * min(rsqrt(sum x^2), 1/eps)  (rsqrt -> EUP)
    q = q_ref[...].astype(jnp.float32)                                   # (tl, D)
    inv_q = jnp.minimum(lax.rsqrt(jnp.sum(q * q, axis=-1, keepdims=True)), 1.0 / eps)
    qn_ref[...] = (q * (inv_q * scale_ref[h])).astype(qn_ref.dtype)      # scale folded in
    k = k_ref[...].astype(jnp.float32)                                   # (tl, D)
    inv_k = jnp.minimum(lax.rsqrt(jnp.sum(k * k, axis=-1, keepdims=True)), 1.0 / eps)
    kn_ref[...] = (k * inv_k).astype(kn_ref.dtype)
    vn_ref[...] = v_ref[...].astype(vn_ref.dtype)


def pallas_norm_split(qkv, q_scale, tl=1024):
    """qkv: (B, L, 3, H, D) bf16; q_scale: (H,) f32 (per-head scale * softmax_scale).
    Returns qn, kn, vn each (B, H, L, D) bf16."""
    B, L, _, H, D = qkv.shape
    tl = _pick_tile(L, tl, align=8)
    grid = (B, H, L // tl)

    def slab_spec(s):
        return pl.BlockSpec((None, tl, None, None, D),
                            lambda b, h, i, s=s: (b, i, s, h, 0))

    out_spec = pl.BlockSpec((None, None, tl, D), lambda b, h, i: (b, h, i, 0))
    out_shape = jax.ShapeDtypeStruct((B, H, L, D), jnp.bfloat16)
    return pl.pallas_call(
        _norm_split_kernel,
        grid=grid,
        in_specs=[
            pl.BlockSpec(memory_space=pltpu.MemorySpace.SMEM),   # per-head scale
            slab_spec(0), slab_spec(1), slab_spec(2),
        ],
        out_specs=(out_spec, out_spec, out_spec),
        out_shape=(out_shape, out_shape, out_shape),
        compiler_params=pltpu.CompilerParams(
            dimension_semantics=("parallel", "parallel", "parallel"),
            vmem_limit_bytes=_VMEM_LIMIT,
        ),
    )(q_scale, qkv, qkv, qkv)


# ------------------- flash-style cosine attention (batched over heads) -------------------

def _attn_kernel(q_ref, k_ref, v_ref, o_ref, m_sc, l_sc, acc_sc, *, Hb, D):
    # grid = (batch, head_group, q_tile, k_tile); k_tile is the reduction axis (last).
    ki = pl.program_id(3)

    @pl.when(ki == 0)
    def _init():
        m_sc[...] = jnp.full(m_sc.shape, -jnp.inf, m_sc.dtype)
        l_sc[...] = jnp.zeros(l_sc.shape, l_sc.dtype)
        acc_sc[...] = jnp.zeros(acc_sc.shape, acc_sc.dtype)

    # q/k are pre-normalised (and q pre-scaled) bf16; whole head-group on the MXU.
    s = jnp.einsum("hqd,hkd->hqk", q_ref[...], k_ref[...],
                   preferred_element_type=jnp.float32)                    # (Hb, tq, tk)

    m_prev = m_sc[...]                                                    # (Hb, tq, 1)
    m_new = jnp.maximum(m_prev, jnp.max(s, axis=-1, keepdims=True))
    alpha = jnp.exp(m_prev - m_new)
    p = jnp.exp(s - m_new)                                                # (Hb, tq, tk)
    l_sc[...] = alpha * l_sc[...] + jnp.sum(p, axis=-1, keepdims=True)
    acc_sc[...] = alpha * acc_sc[...] + jnp.einsum(
        "hqk,hkd->hqd", p.astype(v_ref.dtype), v_ref[...],
        preferred_element_type=jnp.float32)
    m_sc[...] = m_new

    @pl.when(ki == pl.num_programs(3) - 1)
    def _finish():
        out = acc_sc[...] * pl.reciprocal(l_sc[...], approx=True)         # (Hb, tq, D)
        # Direct per-head D-slice stores into the lane-dense (tq, Hb*D) output block
        # (no concatenate copy / relayout in the epilogue).
        for i in range(Hb):
            o_ref[:, i * D:(i + 1) * D] = out[i].astype(o_ref.dtype)


def pallas_attention(qn, kn, vn, tq=512, tk=512):
    """qn/kn/vn: (B, H, L, D) bf16 (q already normalised+scaled, k normalised).
    Returns (B, L, H*D) bf16 with a lane-dense output slab."""
    B, H, L, D = qn.shape
    C = H * D
    Hb = _pick_head_block(H, D)
    HG = H // Hb
    tq = _pick_tile(L, tq, align=8)
    tk = _pick_tile(L, tk, align=8)
    grid = (B, HG, L // tq, L // tk)

    q_spec = pl.BlockSpec((None, Hb, tq, D), lambda b, hg, qi, ki: (b, hg, qi, 0))
    k_spec = pl.BlockSpec((None, Hb, tk, D), lambda b, hg, qi, ki: (b, hg, ki, 0))
    v_spec = pl.BlockSpec((None, Hb, tk, D), lambda b, hg, qi, ki: (b, hg, ki, 0))
    o_spec = pl.BlockSpec((None, tq, Hb * D), lambda b, hg, qi, ki: (b, qi, hg))

    return pl.pallas_call(
        partial(_attn_kernel, Hb=Hb, D=D),
        grid=grid,
        in_specs=[q_spec, k_spec, v_spec],
        out_specs=o_spec,
        out_shape=jax.ShapeDtypeStruct((B, L, C), jnp.bfloat16),
        scratch_shapes=[
            pltpu.VMEM((Hb, tq, 1), jnp.float32),   # running max (lane-padded; small)
            pltpu.VMEM((Hb, tq, 1), jnp.float32),   # running sum
            pltpu.VMEM((Hb, tq, D), jnp.float32),   # output accumulator
        ],
        compiler_params=pltpu.CompilerParams(
            dimension_semantics=("parallel", "parallel", "parallel", "arbitrary"),
            vmem_limit_bytes=_VMEM_LIMIT,
        ),
    )(qn, kn, vn)


# ------------------------------- module forward -------------------------------

def prepare_params(params, num_heads):
    """One-time (load-time) preprocessing: transposed bf16 weights, concatenated qkv
    bias, per-head scale with softmax_scale (=1 for cos_attn) folded in."""
    C = params["w_qkv"].shape[1]
    qkv_bias = jnp.concatenate(
        [params["q_bias"], jnp.zeros((C,), jnp.float32), params["v_bias"]]
    )[None, :]
    softmax_scale = 1.0  # cos_attn=True -> self.scale = 1
    q_scale = (jnp.exp(jnp.minimum(params["scale_mul_1H11"], math.log(100.0)))
               .reshape(num_heads).astype(jnp.float32) * softmax_scale)
    return dict(
        w_qkv_t=params["w_qkv"].T.astype(jnp.bfloat16),    # (C, 3C), cast once
        w_proj_t=params["w_proj"].T.astype(jnp.bfloat16),  # (C, C), cast once
        qkv_bias=qkv_bias,                                  # (1, 3C) f32
        b_proj=params["b_proj"][None, :],                   # (1, C) f32
        q_scale=q_scale,                                    # (H,) f32
    )


def fastvar_self_attention(x, prepared, num_heads):
    """FastVARSelfAttention.forward with cos_attn=True, rope disabled, caching off,
    attn_bias_or_two_vector=None, proj_drop=0."""
    B, L, C = x.shape
    D = C // num_heads

    # QKV projection: bf16 activations/weights on the MXU, f32 accumulate, bf16 out.
    qkv = pallas_linear(x.reshape(B * L, C).astype(jnp.bfloat16),
                        prepared["w_qkv_t"], prepared["qkv_bias"],
                        out_dtype=jnp.bfloat16)
    qkv = qkv.reshape(B, L, 3, num_heads, D)               # row-major: free reshape

    # Normalise q/k exactly once (scale folded into q) and split to (B, H, L, D) slabs.
    qn, kn, vn = pallas_norm_split(qkv, prepared["q_scale"])

    o = pallas_attention(qn, kn, vn)                        # (B, L, C) bf16, lane-dense

    out = pallas_linear(o.reshape(B * L, C), prepared["w_proj_t"],
                        prepared["b_proj"], out_dtype=jnp.float32)
    return out.reshape(B, L, C)


# ----------------------------- pure-JAX reference ------------------------------

def ref_forward(x, params, num_heads):
    B, L, C = x.shape
    D = C // num_heads
    qkv_bias = jnp.concatenate(
        [params["q_bias"], jnp.zeros((C,), jnp.float32), params["v_bias"]]
    )
    qkv = (x.reshape(B * L, C) @ params["w_qkv"].T + qkv_bias).reshape(
        B, L, 3, num_heads, D
    )
    q, k, v = qkv[:, :, 0], qkv[:, :, 1], qkv[:, :, 2]      # (B, L, H, D)
    eps = 1e-12
    qn = q / jnp.maximum(jnp.linalg.norm(q, axis=-1, keepdims=True), eps)
    kn = k / jnp.maximum(jnp.linalg.norm(k, axis=-1, keepdims=True), eps)
    scale_mul = jnp.exp(jnp.minimum(params["scale_mul_1H11"], math.log(100.0)))
    qn = qn * scale_mul
    qn, kn, vv = (jnp.transpose(t, (0, 2, 1, 3)) for t in (qn, kn, v))
    s = jnp.einsum("bhqd,bhkd->bhqk", qn, kn) * 1.0
    p = jax.nn.softmax(s, axis=-1)
    o = jnp.einsum("bhqk,bhkd->bhqd", p, vv)
    o = jnp.transpose(o, (0, 2, 1, 3)).reshape(B * L, C)
    out = o @ params["w_proj"].T + params["b_proj"]
    return out.reshape(B, L, C)


# ------------------------------------ main --------------------------------------

if __name__ == "__main__":
    key = jax.random.PRNGKey(0)
    B, L, C, H = 2, 16, 32, 4

    k1, k2, k3, k4 = jax.random.split(key, 4)
    x = jax.random.normal(k1, (B, L, C), jnp.float32)

    # deterministic parameter init following the module's __init__ shapes
    params = dict(
        w_qkv=jax.random.normal(k2, (3 * C, C), jnp.float32) * 0.02,   # mat_qkv.weight
        q_bias=jnp.zeros((C,), jnp.float32),                           # zero-init Parameter
        v_bias=jnp.zeros((C,), jnp.float32),                           # zero-init Parameter
        scale_mul_1H11=jnp.full((1, 1, H, 1), math.log(4.0), jnp.float32),
        w_proj=jax.random.normal(k3, (C, C), jnp.float32) * 0.02,      # proj.weight
        b_proj=jax.random.normal(k4, (C,), jnp.float32) * 0.02,        # proj.bias
    )

    prepared = prepare_params(params, H)
    out = fastvar_self_attention(x, prepared, H)
    jax.block_until_ready(out)

    ref = ref_forward(x, params, H)
    np.testing.assert_allclose(np.asarray(out), np.asarray(ref), atol=2e-2, rtol=2e-2)

    print("KERNEL_OK")
</pallas_src>

<mosaic_0001>
module attributes {stable_mosaic.version = 11 : i64} {
  func.func @_linear_kernel(%arg0: i32, %arg1: i32, %arg2: i32, %arg3: memref<32x32xbf16, #tpu.memory_space<vmem>>, %arg4: memref<32x96xbf16, #tpu.memory_space<vmem>>, %arg5: memref<1x96xf32, #tpu.memory_space<vmem>>, %arg6: memref<32x96xbf16, #tpu.memory_space<vmem>>, %arg7: memref<32x96xf32, #tpu.memory_space<vmem>>) attributes {dimension_semantics = [#tpu.dimension_semantics<parallel>, #tpu.dimension_semantics<parallel>, #tpu.dimension_semantics<arbitrary>], iteration_bounds = array<i64: 1, 1, 1>, scalar_prefetch = 0 : i64, scratch_operands = 1 : i64, tpu.core_type = #tpu.core_type<tc>, window_params = [{transform_indices = @transform_0, window_bounds = array<i64: 32, 32>}, {transform_indices = @transform_1, window_bounds = array<i64: 32, 96>}, {transform_indices = @transform_2, window_bounds = array<i64: 1, 96>}, {transform_indices = @transform_3, window_bounds = array<i64: 32, 96>}]} {
    %c0_i32 = arith.constant 0 : i32
    %0 = arith.cmpi eq, %arg2, %c0_i32 : i32
    %1 = arith.extui %0 : i1 to i32
    %c0_i32_0 = arith.constant 0 : i32
    %2 = arith.cmpi ne, %1, %c0_i32_0 : i32
    scf.if %2 {
      %cst_10 = arith.constant 0.000000e+00 : f32
      %12 = vector.broadcast %cst_10 : f32 to vector<32x96xf32>
      %c0_11 = arith.constant 0 : index
      %c0_12 = arith.constant 0 : index
      %13 = vector.load %arg7[%c0_11, %c0_12] : memref<32x96xf32, #tpu.memory_space<vmem>>, vector<32x96xf32>
      tpu.vector_store %arg7[%c0_11, %c0_12], %12 {strides = array<i32>} : memref<32x96xf32, #tpu.memory_space<vmem>>, vector<32x96xf32>,
    } else {
    }
    %c0 = arith.constant 0 : index
    %c0_1 = arith.constant 0 : index
    %3 = vector.load %arg7[%c0, %c0_1] : memref<32x96xf32, #tpu.memory_space<vmem>>, vector<32x96xf32>
    %c0_2 = arith.constant 0 : index
    %c0_3 = arith.constant 0 : index
    %4 = vector.load %arg3[%c0_2, %c0_3] : memref<32x32xbf16, #tpu.memory_space<vmem>>, vector<32x32xbf16>
    %c0_4 = arith.constant 0 : index
    %c0_5 = arith.constant 0 : index
    %5 = vector.load %arg4[%c0_4, %c0_5] : memref<32x96xbf16, #tpu.memory_space<vmem>>, vector<32x96xbf16>
    %cst = arith.constant dense<0.000000e+00> : vector<32x96xf32>
    %6 = tpu.matmul %4, %5, %cst {dimension_numbers = #tpu.dot_dimension_numbers<[1], [0], [0], [1], [0, 0, 1, 1], [], []>} : vector<32x32xbf16>, vector<32x96xbf16>, vector<32x96xf32> -> vector<32x96xf32>
    %7 = arith.addf %3, %6 : vector<32x96xf32>
    %c0_6 = arith.constant 0 : index
    %c0_7 = arith.constant 0 : index
    %8 = vector.load %arg7[%c0_6, %c0_7] : memref<32x96xf32, #tpu.memory_space<vmem>>, vector<32x96xf32>
    tpu.vector_store %arg7[%c0_6, %c0_7], %7 {strides = array<i32>} : memref<32x96xf32, #tpu.memory_space<vmem>>, vector<32x96xf32>,
    %c0_i32_8 = arith.constant 0 : i32
    %9 = arith.cmpi eq, %arg2, %c0_i32_8 : i32
    %10 = arith.extui %9 : i1 to i32
    %c0_i32_9 = arith.constant 0 : i32
    %11 = arith.cmpi ne, %10, %c0_i32_9 : i32
    scf.if %11 {
      %c0_10 = arith.constant 0 : index
      %c0_11 = arith.constant 0 : index
      %12 = vector.load %arg7[%c0_10, %c0_11] : memref<32x96xf32, #tpu.memory_space<vmem>>, vector<32x96xf32>
      %c0_12 = arith.constant 0 : index
      %c0_13 = arith.constant 0 : index
      %13 = vector.load %arg5[%c0_12, %c0_13] : memref<1x96xf32, #tpu.memory_space<vmem>>, vector<1x96xf32>
      %14 = vector.broadcast %13 : vector<1x96xf32> to vector<32x96xf32>
      %15 = arith.addf %12, %14 : vector<32x96xf32>
      %16 = arith.truncf %15 : vector<32x96xf32> to vector<32x96xbf16>
      %c0_14 = arith.constant 0 : index
      %c0_15 = arith.constant 0 : index
      %17 = vector.load %arg6[%c0_14, %c0_15] : memref<32x96xbf16, #tpu.memory_space<vmem>>, vector<32x96xbf16>
      tpu.vector_store %arg6[%c0_14, %c0_15], %16 {strides = array<i32>} : memref<32x96xbf16, #tpu.memory_space<vmem>>, vector<32x96xbf16>,
    } else {
    }
    return
  }
  func.func @transform_0(%arg0: i32, %arg1: i32, %arg2: i32) -> (i32, i32) {
    %c0_i32 = arith.constant 0 : i32
    return %arg0, %arg2 : i32, i32
  }
  func.func @transform_1(%arg0: i32, %arg1: i32, %arg2: i32) -> (i32, i32) {
    %c0_i32 = arith.constant 0 : i32
    return %arg2, %arg1 : i32, i32
  }
  func.func @transform_2(%arg0: i32, %arg1: i32, %arg2: i32) -> (i32, i32) {
    %c0_i32 = arith.constant 0 : i32
    %c0_i32_0 = arith.constant 0 : i32
    return %c0_i32, %arg1 : i32, i32
  }
  func.func @transform_3(%arg0: i32, %arg1: i32, %arg2: i32) -> (i32, i32) {
    %c0_i32 = arith.constant 0 : i32
    return %arg0, %arg1 : i32, i32
  }
}

</mosaic_0001>

<llo_original>
// kernel: tpu_custom_call.1
$region0: #{tpu_custom_call.1}
  #allocation0 [shape = 'u32[]', space=smem, size = 0x4, offset = 0x4, fixed_abs, tag = 'smem constant byte address 0x4 - core index']
  #allocation1 [shape = 'u32[144,128]{1,0:T(1,128)}', space=vmem, size = 0x12000, scoped, tag = 'internal scratch']
  #allocation2 [shape = 'f32[32,96]{1,0:T(8,128)}', space=vmem, size = 0x4000, scoped, tag = 'scratch operand']
  %s0 = inlined_call_operand.hbm [shape: bf16[32,32], index: 0, kind: input, shape index: {}]
  %s1 = inlined_call_operand.hbm [shape: bf16[32,96], index: 1, kind: input, shape index: {}]
  %s2 = inlined_call_operand.vmem [shape: f32[1,96], index: 2, kind: input, shape index: {}]
  %s3 = inlined_call_operand.hbm [shape: bf16[32,96], index: 3, kind: output, shape index: {}]
  %s4 = sld [smem:[#allocation0]]
  $region38: #{tpu_custom_call.1} parent=0
    _
  %s6 = ssub.s32 1, %s4
  %s7 = scalar_select 0, %s6, %s4
  $region1: #{tpu_custom_call.1} parent=0
    #allocation3 [shape = 'u8[8192]{0}', space=vmem, size = 0x2000, scoped, tag = 'input window, operand 0, single buffered']
    #allocation4 [shape = 's32[1]{0}', space=sflag, size = 0x4, scoped, tag = 'scoped memory for tpu_custom_call.1']
    #allocation5 [shape = 's32[1]{0}', space=sflag, size = 0x4, scoped, tag = 'scoped memory for tpu_custom_call.1']
    #allocation6 [shape = 'u8[8192]{0}', space=vmem, size = 0x2000, scoped, tag = 'input window, operand 1, single buffered']
    #allocation7 [shape = 's32[1]{0}', space=sflag, size = 0x4, scoped, tag = 'scoped memory for tpu_custom_call.1']
    #allocation8 [shape = 'u8[8192]{0}', space=vmem, size = 0x2000, scoped, tag = 'output window, operand 0, single buffered']
    %8 = vsyncpa [#allocation4], 0
    %9 = vsyncpa [#allocation7], 0
    %10 = vsyncpa [#allocation5], 0
    // Predicated region
    $region2: #{tpu_custom_call.1} parent=1 // pred_check
      _
    $region3: #{tpu_custom_call.1} parent=1 // pred_check_branch
      %12 = sbr.rel (0) target = $region5
    $region4: #{tpu_custom_call.1} parent=1 // pred_region
      %s14 = ssub.s32 256, 256
      %15 = vsyncadd [#allocation4], %s14
      %s16 = sshll.u32 [#allocation3], 4
      %s17 = int_to_ptr.vmem [resolvable:$true] %s16
      %22 = dma.hbm_to_vmem [thread:$0]  %s0, 256, %s17, [#allocation4], 64, 64, 4
    $region5: #{tpu_custom_call.1} parent=1 // pred_fallthru
      _
    // Predicated region
    $region6: #{tpu_custom_call.1} parent=1 // pred_check
      _
    $region7: #{tpu_custom_call.1} parent=1 // pred_check_branch
      %24 = sbr.rel (0) target = $region9
    $region8: #{tpu_custom_call.1} parent=1 // pred_region
      %s26 = ssub.s32 256, 256
      %27 = vsyncadd [#allocation7], %s26
      %s28 = sshll.u32 [#allocation6], 4
      %s29 = int_to_ptr.vmem [resolvable:$true] %s28
      %34 = dma.hbm_to_vmem [thread:$0]  %s1, 256, %s29, [#allocation7], 64, 64, 4
    $region9: #{tpu_custom_call.1} parent=1 // pred_fallthru
      _
    // Predicated region
    $region10: #{tpu_custom_call.1} parent=1 // pred_check
      _
    $region11: #{tpu_custom_call.1} parent=1 // pred_check_branch
      %36 = sbr.rel (0) target = $region13
    $region12: #{tpu_custom_call.1} parent=1 // pred_region
      _
    $region13: #{tpu_custom_call.1} parent=1 // pred_fallthru
      _
    // Predicated region
    $region14: #{tpu_custom_call.1} parent=1 // pred_check
      _
    $region15: #{tpu_custom_call.1} parent=1 // pred_check_branch
      %38 = sbr.rel (0) target = $region17
    $region16: #{tpu_custom_call.1} parent=1 // pred_region
      %39 = dma.done [#allocation4], 256
    $region17: #{tpu_custom_call.1} parent=1 // pred_fallthru
      _
    // Predicated region
    $region18: #{tpu_custom_call.1} parent=1 // pred_check
      _
    $region19: #{tpu_custom_call.1} parent=1 // pred_check_branch
      %41 = sbr.rel (0) target = $region21
    $region20: #{tpu_custom_call.1} parent=1 // pred_region
      %42 = dma.done [#allocation7], 256
    $region21: #{tpu_custom_call.1} parent=1 // pred_fallthru
      _
    %p44 = scmp.eq.s32.totalorder 0, 0
    // Predicated region
    $region22: #{tpu_custom_call.1} parent=1 // pred_check
      %p45 = pneg %p44
    $region23: #{tpu_custom_call.1} parent=1 // pred_check_branch
      %47 = sbr.rel (%p45) target = $region25
    $region24: #{tpu_custom_call.1} parent=1 // pred_region
      %vm48 = vcmask 785408
      %49 = vst.msk [vmem:[#allocation2] sm:$0xff] %vm48, 0.0
      %50 = vst.msk [vmem:[#allocation2 + $0x8] sm:$0xff] %vm48, 0.0
      %51 = vst.msk [vmem:[#allocation2 + $0x10] sm:$0xff] %vm48, 0.0
      %52 = vst.msk [vmem:[#allocation2 + $0x18] sm:$0xff] %vm48, 0.0
    $region25: #{tpu_custom_call.1} parent=1 // pred_fallthru
      _
    %v53 = vld [vmem:[#allocation2] sm:$0xff]
    %v54 = vld [vmem:[#allocation2 + $0x8] sm:$0xff]
    %v55 = vld [vmem:[#allocation2 + $0x10] sm:$0xff]
    %v56 = vld [vmem:[#allocation2 + $0x18] sm:$0xff]
    %v57 = vld [vmem:[#allocation3] sm:$0xf]
    %v58 = vld [vmem:[#allocation3 + $0x4] sm:$0xf]
    %v59 = vld [vmem:[#allocation3 + $0x8] sm:$0xf]
    %v60 = vld [vmem:[#allocation3 + $0xc] sm:$0xf]
    %v61 = vld [vmem:[#allocation6] sm:$0xf]
    %v62 = vld [vmem:[#allocation6 + $0x4] sm:$0xf]
    %v63 = vld [vmem:[#allocation6 + $0x8] sm:$0xf]
    %v64 = vld [vmem:[#allocation6 + $0xc] sm:$0xf]
    %v69 = vunpack.c.l.b16 %v57
    %v70 = vunpack.c.l.b16 %v58
    %v71 = vunpack.c.l.b16 %v59
    %v72 = vunpack.c.l.b16 %v60
    %v73 = vpack.c.b16 %v70, %v69
    %v74 = vpack.c.b16 %v72, %v71
    %v79 = vunpack.c.l.b16 %v61
    %v80 = vunpack.c.l.b16 %v62
    %v81 = vunpack.c.l.b16 %v63
    %v82 = vunpack.c.l.b16 %v64
    %v83 = vpack.c.b16 %v80, %v79
    %v84 = vpack.c.b16 %v82, %v81
    %vm87 = vcmask 261120
    %v89 = vsel %vm87, %v73, 0
    %v92 = vsel %vm87, %v74, 0
    %94 = vmatprep.subr.bf16.mxu0 0
    %95 = vmatpush1.bf16.msra.mxu0 %v83
    %96 = vmatprep.subr.bf16.mxu0 0
    %97 = vmatpush1.bf16.msra.mxu0 %v84
    %98 = vmatprep.subr.bf16.mxu0 0
    %99 = vmatpush1.bf16.msra.mxu0 0
    %100 = vmatprep.subr.bf16.mxu0 0
    %101 = vmatpush1.bf16.msra.mxu0 0
    %102 = vmatprep.subr.bf16.mxu0 0
    %103 = vmatpush1.bf16.msra.mxu0 0
    %104 = vmatprep.subr.bf16.mxu0 0
    %105 = vmatpush1.bf16.msra.mxu0 0
    %106 = vmatprep.subr.bf16.mxu0 0
    %107 = vmatpush1.bf16.msra.mxu0 0
    %108 = vmatprep.subr.bf16.mxu0 0
    %109 = vmatpush1.bf16.msra.mxu0 0
    %110 = vmatprep.subr.bf16.mxu0 0
    %111 = vmatpush1.bf16.msra.mxu0 0
    %112 = vmatprep.subr.bf16.mxu0 0
    %113 = vmatpush1.bf16.msra.mxu0 0
    %114 = vmatprep.subr.bf16.mxu0 0
    %115 = vmatpush1.bf16.msra.mxu0 0
    %116 = vmatprep.subr.bf16.mxu0 0
    %117 = vmatpush1.bf16.msra.mxu0 0
    %118 = vmatprep.subr.bf16.mxu0 0
    %119 = vmatpush1.bf16.msra.mxu0 0
    %120 = vmatprep.subr.bf16.mxu0 0
    %121 = vmatpush1.bf16.msra.mxu0 0
    %122 = vmatprep.subr.bf16.mxu0 0
    %123 = vmatpush1.bf16.msra.mxu0 0
    %124 = vmatprep.subr.bf16.mxu0 0
    %125 = vmatpush1.bf16.msra.mxu0 0
    %126 = vmatprep.mubr.bf16.mxu0 0
    %127 = vmatmul.mubr.bf16.gmra.mrb[0].mxu0 %v89
    %v128 = vpop.f32.mrb[0].mxu0
    %v129 = vadd.f32 0.0, %v128
    %v130 = vpop.f32.mrb[0].mxu0
    %v131 = vpop.f32.mrb[0].mxu0
    %v132 = vadd.f32 0.0, %v131
    %v133 = vpop.f32.mrb[0].mxu0
    %134 = vmatprep.mubr.bf16.mxu0 0
    %135 = vmatmul.mubr.bf16.gmra.mrb[0].mxu0 %v92
    %v136 = vpop.f32.mrb[0].mxu0
    %v137 = vadd.f32 0.0, %v136
    %v138 = vpop.f32.mrb[0].mxu0
    %v139 = vpop.f32.mrb[0].mxu0
    %v140 = vadd.f32 0.0, %v139
    %v141 = vpop.f32.mrb[0].mxu0
    %142 = vdwg.mxu0
    %v143 = vadd.f32 %v53, %v129
    %v144 = vadd.f32 %v54, %v132
    %v145 = vadd.f32 %v55, %v137
    %v146 = vadd.f32 %v56, %v140
    %vm147 = vcmask 785408
    %148 = vst.msk [vmem:[#allocation2] sm:$0xff] %vm147, %v143
    %149 = vst.msk [vmem:[#allocation2 + $0x8] sm:$0xff] %vm147, %v144
    %150 = vst.msk [vmem:[#allocation2 + $0x10] sm:$0xff] %vm147, %v145
    %151 = vst.msk [vmem:[#allocation2 + $0x18] sm:$0xff] %vm147, %v146
    // Predicated region
    $region26: #{tpu_custom_call.1} parent=1 // pred_check
      %p152 = pneg %p44
    $region27: #{tpu_custom_call.1} parent=1 // pred_check_branch
      %154 = sbr.rel (%p152) target = $region29
    $region28: #{tpu_custom_call.1} parent=1 // pred_region
      %v155 = vld [vmem:[#allocation2] sm:$0xff]
      %v156 = vld [vmem:[#allocation2 + $0x8] sm:$0xff]
      %v157 = vld [vmem:[#allocation2 + $0x10] sm:$0xff]
      %v158 = vld [vmem:[#allocation2 + $0x18] sm:$0xff]
      %v159 = vld [vmem:[%s2] sm:$0x1]
      %v161 = vlaneseq
      %v162 = vshrl.u32 %v161, 7
      %v163 = vsub.s32 0, %v162
      %v164 = vrot.slane %v159, %v163
      %v166 = vadd.f32 %v155, %v164
      %v167 = vadd.f32 %v156, %v164
      %v168 = vadd.f32 %v157, %v164
      %v169 = vadd.f32 %v158, %v164
      %v170 = vpack.c.bf16 %v167, %v166
      %v171 = vpack.c.bf16 %v169, %v168
      %v174 = vunpack.c.l.b16 %v170
      %v175 = vunpack.c.h.b16 %v170
      %v176 = vunpack.c.l.b16 %v171
      %v177 = vunpack.c.h.b16 %v171
      %v178 = vpack.c.b16 %v174, %v174
      %v179 = vpack.c.b16 %v175, %v175
      %v180 = vpack.c.b16 %v176, %v176
      %v181 = vpack.c.b16 %v177, %v177
      %vm186 = vcmask 781312
      %187 = vst.msk [vmem:[#allocation8] sm:$0xf] %vm186, %v178
      %188 = vst.msk [vmem:[#allocation8 + $0x4] sm:$0xf] %vm186, %v179
      %189 = vst.msk [vmem:[#allocation8 + $0x8] sm:$0xf] %vm186, %v180
      %190 = vst.msk [vmem:[#allocation8 + $0xc] sm:$0xf] %vm186, %v181
    $region29: #{tpu_custom_call.1} parent=1 // pred_fallthru
      _
    // Predicated region
    $region30: #{tpu_custom_call.1} parent=1 // pred_check
      _
    $region31: #{tpu_custom_call.1} parent=1 // pred_check_branch
      %192 = sbr.rel (0) target = $region33
    $region32: #{tpu_custom_call.1} parent=1 // pred_region
      %s194 = ssub.s32 256, 256
      %195 = vsyncadd [#allocation5], %s194
      %s196 = sshll.u32 [#allocation8], 4
      %s197 = int_to_ptr.vmem [resolvable:$true] %s196
      %202 = dma.vmem_to_hbm [thread:$0]  %s197, 256, %s3, [#allocation5], 64, 64, 4
    $region33: #{tpu_custom_call.1} parent=1 // pred_fallthru
      _
    // Predicated region
    $region34: #{tpu_custom_call.1} parent=1 // pred_check
      _
    $region35: #{tpu_custom_call.1} parent=1 // pred_check_branch
      %204 = sbr.rel (0) target = $region37
    $region36: #{tpu_custom_call.1} parent=1 // pred_region
      %205 = dma.done [#allocation5], 256
    $region37: #{tpu_custom_call.1} parent=1 // pred_fallthru
      _
    %206 = vsyncpa [#allocation4], 1
    %207 = vsyncpa [#allocation7], 1
    %208 = vsyncpa [#allocation5], 1

</llo_original>
